<compile_context>
chip_gen: v7x
topology: tpu7x:2x2x1
jax: 0.10.0
libtpu: 0.0.40
codegen_flags: <defaults>
</compile_context>

<pallas_src>
import functools

import jax
import jax.numpy as jnp
from jax import lax
from jax.experimental import pallas as pl
from jax.experimental.pallas import tpu as pltpu


TB_MIN = 128     # lane-dense minimum batch tile
TB_MAX = 1024    # cap: per-tile one-hot + h stay well under VMEM on all gens


def _round_up(x, m):
    return (x + m - 1) // m * m


def _choose_tb(batch):
    # >=2 grid steps whenever the batch allows it (v7x 2-TC sharding), 128-aligned.
    tb = _round_up(max(1, -(-batch // 2)), TB_MIN)
    return max(TB_MIN, min(TB_MAX, tb))


# -----------------------------------------------------------------------------
# Fused kernel (one grid step = one batch tile of TB ids on the lane axis):
#   uid_ref : (1, 1, TB) int32   user ids, lane-dense
#   iid_ref : (1, 1, TB) int32   item ids, lane-dense
#   tab_ref : (H, R)     f32     stacked fused table [user_emb@W1u + b1 ; item_emb@W1v]^T
#   w2_ref  : (H, 1)     f32     fc2 weight column (reduction, not MXU)
#   b2_ref  : (1, 1)     f32     fc2 bias, SMEM scalar
#   o_ref   : (1, 1, TB) f32     sigmoid probabilities, lane-dense
# -----------------------------------------------------------------------------
def _make_kernel(item_row_offset):
    def kernel(uid_ref, iid_ref, tab_ref, w2_ref, b2_ref, o_ref):
        n_rows = tab_ref.shape[1]
        tb = uid_ref.shape[-1]

        uid = uid_ref[0]                                    # (1, TB)
        iid = iid_ref[0] + item_row_offset                  # (1, TB), shifted into item rows

        # Combined one-hot over the stacked fused table (user rows, then item rows).
        # NOTE: out-of-range ids yield an all-zero column (zero embedding) instead of
        # an error like nn.Embedding; ids are assumed pre-validated.
        rows = lax.broadcasted_iota(jnp.int32, (n_rows, tb), 0)
        onehot = jnp.logical_or(rows == uid, rows == iid).astype(jnp.float32)  # (R, TB)

        # Single MXU matmul produces the fc1 pre-activation directly (b1 folded in).
        h = jnp.dot(tab_ref[...], onehot, preferred_element_type=jnp.float32)  # (H, TB)
        h = jnp.maximum(h, 0.0)

        # fc2 (output width 1) as VPU multiply + cross-sublane reduce.
        logit = jnp.sum(h * w2_ref[...], axis=0, keepdims=True) + b2_ref[0, 0]  # (1, TB)
        o_ref[0] = jax.nn.sigmoid(logit)

    return kernel


@functools.partial(jax.jit, static_argnames=("item_row_offset",))
def classification_forward_pallas(user_ids, item_ids, fused_tab_t, w2_col, b2,
                                  *, item_row_offset):
    B = user_ids.shape[0]
    tb = _choose_tb(B)
    num_tiles = -(-B // tb)
    b_pad = num_tiles * tb
    pad = b_pad - B

    uid = jnp.pad(user_ids.astype(jnp.int32), (0, pad)).reshape(num_tiles, 1, tb)
    iid = jnp.pad(item_ids.astype(jnp.int32), (0, pad)).reshape(num_tiles, 1, tb)

    H, R = fused_tab_t.shape

    out = pl.pallas_call(
        _make_kernel(item_row_offset),
        out_shape=jax.ShapeDtypeStruct((num_tiles, 1, tb), jnp.float32),
        grid=(num_tiles,),
        in_specs=[
            pl.BlockSpec((1, 1, tb), lambda i: (i, 0, 0)),       # user ids (lane-dense)
            pl.BlockSpec((1, 1, tb), lambda i: (i, 0, 0)),       # item ids (lane-dense)
            pl.BlockSpec((H, R), lambda i: (0, 0)),              # fused table (resident)
            pl.BlockSpec((H, 1), lambda i: (0, 0)),              # w2 column (resident)
            pl.BlockSpec(memory_space=pltpu.MemorySpace.SMEM),   # b2 scalar
        ],
        out_specs=pl.BlockSpec((1, 1, tb), lambda i: (i, 0, 0)),
        compiler_params=pltpu.CompilerParams(
            dimension_semantics=("parallel",)),
    )(uid, iid, fused_tab_t, w2_col, b2)

    return out.reshape(b_pad)[:B].reshape(B, 1)


# -----------------------------------------------------------------------------
# Model wrapper mirroring ClassificationModel(embedding_size, max_user_id,
# max_item_id). Parameters initialized deterministically in-script; the
# embedding->fc1 algebraic fusion and kernel layouts are precomputed once.
# -----------------------------------------------------------------------------
class ClassificationModelPallas:
    def __init__(self, embedding_size, max_user_id, max_item_id, hidden=32):
        key = jax.random.PRNGKey(0)
        k_u, k_i, k_w1, k_w2 = jax.random.split(key, 4)
        E = embedding_size
        self.user_emb = 0.05 * jax.random.normal(
            k_u, (max_user_id + 1, E), dtype=jnp.float32)
        self.item_emb = 0.05 * jax.random.normal(
            k_i, (max_item_id + 1, E), dtype=jnp.float32)
        self.w1 = 0.1 * jax.random.normal(k_w1, (2 * E, hidden), dtype=jnp.float32)
        self.b1 = jnp.zeros((1, hidden), dtype=jnp.float32)
        self.w2 = 0.1 * jax.random.normal(k_w2, (hidden, 1), dtype=jnp.float32)
        self.b2 = jnp.zeros((1, 1), dtype=jnp.float32)

        # ---- one-time algebraic fusion of the embedding lookup into fc1 ----
        # h(uid, iid) = relu(concat(u, v) @ W1 + b1)
        #            == relu(Tu[uid] + Tv[iid]),  Tu = user_emb @ W1_user + b1,
        #                                         Tv = item_emb @ W1_item.
        u_rows, i_rows = self.user_emb.shape[0], self.item_emb.shape[0]
        u_pad, i_pad = _round_up(u_rows, 8), _round_up(i_rows, 8)
        h_pad = _round_up(hidden, 8)

        ue_p = jnp.zeros((u_pad, E), jnp.float32).at[:u_rows].set(self.user_emb)
        ie_p = jnp.zeros((i_pad, E), jnp.float32).at[:i_rows].set(self.item_emb)
        tu = ue_p @ self.w1[:E] + self.b1                    # (U_pad, H), b1 folded in
        tv = ie_p @ self.w1[E:]                              # (I_pad, H)
        tab = jnp.concatenate([tu, tv], axis=0)              # (U_pad + I_pad, H)
        self._fused_tab_t = (
            jnp.zeros((u_pad + i_pad, h_pad), jnp.float32).at[:, :hidden].set(tab)).T
        self._w2_col = jnp.zeros((h_pad, 1), jnp.float32).at[:hidden].set(self.w2)
        self._b2 = self.b2
        self._item_row_offset = u_pad                        # static python int

    def forward(self, inputs):
        # inputs: (user_ids, item_ids), each int of shape (B,)
        user_ids, item_ids = inputs
        return classification_forward_pallas(
            user_ids, item_ids, self._fused_tab_t, self._w2_col, self._b2,
            item_row_offset=self._item_row_offset)


def _reference_forward(model, inputs):
    user_ids, item_ids = inputs
    u = jnp.take(model.user_emb, user_ids, axis=0)
    v = jnp.take(model.item_emb, item_ids, axis=0)
    x = jnp.concatenate([u, v], axis=-1)
    h = jnp.maximum(x @ model.w1 + model.b1, 0.0)
    return jax.nn.sigmoid(h @ model.w2 + model.b2)


if __name__ == "__main__":
    embedding_size = 32
    max_user_id = 50
    max_item_id = 100
    batch = 8

    model = ClassificationModelPallas(embedding_size, max_user_id, max_item_id)

    key = jax.random.PRNGKey(0)
    k_u, k_i = jax.random.split(key)
    user_ids = jax.random.randint(k_u, (batch,), 0, max_user_id + 1, dtype=jnp.int32)
    item_ids = jax.random.randint(k_i, (batch,), 0, max_item_id + 1, dtype=jnp.int32)

    out = model.forward((user_ids, item_ids))
    out = jax.block_until_ready(out)

    ref = _reference_forward(model, (user_ids, item_ids))
    assert out.shape == (batch, 1)
    assert jnp.allclose(out, ref, atol=1e-5, rtol=1e-5)

    print("KERNEL_OK")
</pallas_src>

<mosaic_0001>
module attributes {stable_mosaic.version = 11 : i64} {
  func.func @kernel(%arg0: i32, %arg1: memref<1x1x128xi32, #tpu.memory_space<vmem>>, %arg2: memref<1x1x128xi32, #tpu.memory_space<vmem>>, %arg3: memref<32x160xf32, #tpu.memory_space<vmem>>, %arg4: memref<32x1xf32, #tpu.memory_space<vmem>>, %arg5: memref<1x1xf32, #tpu.memory_space<smem>>, %arg6: memref<1x1x128xf32, #tpu.memory_space<vmem>>) attributes {dimension_semantics = [#tpu.dimension_semantics<parallel>], iteration_bounds = array<i64: 1>, scalar_prefetch = 0 : i64, scratch_operands = 0 : i64, tpu.core_type = #tpu.core_type<tc>, window_params = [{transform_indices = @transform_0, window_bounds = array<i64: 1, 1, 128>}, {transform_indices = @transform_1, window_bounds = array<i64: 1, 1, 128>}, {pipeline_mode = #tpu.pipeline_mode<synchronous>, transform_indices = @transform_2, window_bounds = array<i64: 32, 160>}, {pipeline_mode = #tpu.pipeline_mode<synchronous>, transform_indices = @transform_3, window_bounds = array<i64: 32, 1>}, {transform_indices = @transform_4, window_bounds = array<i64: 1, 1>}, {transform_indices = @transform_5, window_bounds = array<i64: 1, 1, 128>}]} {
    %c0 = arith.constant 0 : index
    %c0_0 = arith.constant 0 : index
    %c0_1 = arith.constant 0 : index
    %0 = vector.load %arg1[%c0, %c0_0, %c0_1] : memref<1x1x128xi32, #tpu.memory_space<vmem>>, vector<1x1x128xi32>
    %1 = vector.shape_cast %0 : vector<1x1x128xi32> to vector<1x128xi32>
    %c0_2 = arith.constant 0 : index
    %c0_3 = arith.constant 0 : index
    %c0_4 = arith.constant 0 : index
    %2 = vector.load %arg2[%c0_2, %c0_3, %c0_4] : memref<1x1x128xi32, #tpu.memory_space<vmem>>, vector<1x1x128xi32>
    %3 = vector.shape_cast %2 : vector<1x1x128xi32> to vector<1x128xi32>
    %c56_i32 = arith.constant 56 : i32
    %4 = vector.broadcast %c56_i32 : i32 to vector<1x128xi32>
    %5 = arith.addi %3, %4 : vector<1x128xi32>
    %6 = tpu.iota {dimensions = array<i32: 0>} : vector<160x128xi32>
    %7 = vector.broadcast %1 : vector<1x128xi32> to vector<160x128xi32>
    %8 = arith.cmpi eq, %6, %7 : vector<160x128xi32>
    %9 = vector.broadcast %5 : vector<1x128xi32> to vector<160x128xi32>
    %10 = arith.cmpi eq, %6, %9 : vector<160x128xi32>
    %11 = arith.ori %8, %10 : vector<160x128xi1>
    %12 = arith.extui %11 : vector<160x128xi1> to vector<160x128xi32>
    %13 = arith.sitofp %12 : vector<160x128xi32> to vector<160x128xf32>
    %c0_5 = arith.constant 0 : index
    %c0_6 = arith.constant 0 : index
    %14 = vector.load %arg3[%c0_5, %c0_6] : memref<32x160xf32, #tpu.memory_space<vmem>>, vector<32x160xf32>
    %cst = arith.constant dense<0.000000e+00> : vector<32x128xf32>
    %15 = tpu.matmul %14, %13, %cst {dimension_numbers = #tpu.dot_dimension_numbers<[1], [0], [0], [1], [0, 0, 1, 1], [], []>} : vector<32x160xf32>, vector<160x128xf32>, vector<32x128xf32> -> vector<32x128xf32>
    %cst_7 = arith.constant 0.000000e+00 : f32
    %16 = vector.broadcast %cst_7 : f32 to vector<32x128xf32>
    %17 = arith.maximumf %15, %16 : vector<32x128xf32>
    %c0_8 = arith.constant 0 : index
    %c0_9 = arith.constant 0 : index
    %18 = vector.load %arg4[%c0_8, %c0_9] : memref<32x1xf32, #tpu.memory_space<vmem>>, vector<32x1xf32>
    %19 = vector.broadcast %18 : vector<32x1xf32> to vector<32x128xf32>
    %20 = arith.mulf %17, %19 : vector<32x128xf32>
    %cst_10 = arith.constant dense<0.000000e+00> : vector<128xf32>
    %21 = vector.multi_reduction <add>, %20, %cst_10 [0] : vector<32x128xf32> to vector<128xf32>
    %22 = vector.shape_cast %21 : vector<128xf32> to vector<1x128xf32>
    %c0_11 = arith.constant 0 : index
    %c0_12 = arith.constant 0 : index
    %23 = memref.load %arg5[%c0_11, %c0_12] : memref<1x1xf32, #tpu.memory_space<smem>>
    %24 = vector.broadcast %23 : f32 to vector<1x128xf32>
    %25 = arith.addf %22, %24 : vector<1x128xf32>
    %26 = arith.negf %25 : vector<1x128xf32>
    %27 = math.exp %26 : vector<1x128xf32>
    %cst_13 = arith.constant 1.000000e+00 : f32
    %28 = vector.broadcast %cst_13 : f32 to vector<1x128xf32>
    %29 = arith.addf %28, %27 : vector<1x128xf32>
    %30 = arith.divf %28, %29 : vector<1x128xf32>
    %c0_14 = arith.constant 0 : index
    %c0_15 = arith.constant 0 : index
    %c0_16 = arith.constant 0 : index
    %31 = vector.load %arg6[%c0_14, %c0_15, %c0_16] : memref<1x1x128xf32, #tpu.memory_space<vmem>>, vector<1x1x128xf32>
    %32 = vector.shape_cast %31 : vector<1x1x128xf32> to vector<1x128xf32>
    %33 = vector.shape_cast %30 : vector<1x128xf32> to vector<1x1x128xf32>
    tpu.vector_store %arg6[%c0_14, %c0_15, %c0_16], %33 {strides = array<i32>} : memref<1x1x128xf32, #tpu.memory_space<vmem>>, vector<1x1x128xf32>,
    return
  }
  func.func @transform_0(%arg0: i32) -> (i32, i32, i32) {
    %c0_i32 = arith.constant 0 : i32
    %c0_i32_0 = arith.constant 0 : i32
    %c0_i32_1 = arith.constant 0 : i32
    return %arg0, %c0_i32, %c0_i32_0 : i32, i32, i32
  }
  func.func @transform_1(%arg0: i32) -> (i32, i32, i32) {
    %c0_i32 = arith.constant 0 : i32
    %c0_i32_0 = arith.constant 0 : i32
    %c0_i32_1 = arith.constant 0 : i32
    return %arg0, %c0_i32, %c0_i32_0 : i32, i32, i32
  }
  func.func @transform_2(%arg0: i32) -> (i32, i32) {
    %c0_i32 = arith.constant 0 : i32
    %c0_i32_0 = arith.constant 0 : i32
    %c0_i32_1 = arith.constant 0 : i32
    return %c0_i32, %c0_i32_0 : i32, i32
  }
  func.func @transform_3(%arg0: i32) -> (i32, i32) {
    %c0_i32 = arith.constant 0 : i32
    %c0_i32_0 = arith.constant 0 : i32
    %c0_i32_1 = arith.constant 0 : i32
    return %c0_i32, %c0_i32_0 : i32, i32
  }
  func.func @transform_4(%arg0: i32) -> (i32, i32) {
    %c0_i32 = arith.constant 0 : i32
    %c0_i32_0 = arith.constant 0 : i32
    %c0_i32_1 = arith.constant 0 : i32
    return %c0_i32, %c0_i32_0 : i32, i32
  }
  func.func @transform_5(%arg0: i32) -> (i32, i32, i32) {
    %c0_i32 = arith.constant 0 : i32
    %c0_i32_0 = arith.constant 0 : i32
    %c0_i32_1 = arith.constant 0 : i32
    return %arg0, %c0_i32, %c0_i32_0 : i32, i32, i32
  }
}

</mosaic_0001>

<llo_original>
// kernel: classification_forward_pallas.1
$region0: #{classification_forward_pallas.1}
  #allocation0 [shape = 'u32[]', space=smem, size = 0x4, offset = 0x4, fixed_abs, tag = 'smem constant byte address 0x4 - core index']
  #allocation1 [shape = 'u32[144,128]{1,0:T(1,128)}', space=vmem, size = 0x12000, scoped, tag = 'internal scratch']
  #allocation2 [shape = 'f32[1,1]{1,0:T(1,128)S(6)}', space=smem, size = 0x200, scoped, tag = 'scoped memory for classification_forward_pallas.1']
  %s0 = inlined_call_operand.vmem [shape: s32[1,1,128], index: 0, kind: input, shape index: {}]
  %s1 = inlined_call_operand.vmem [shape: s32[1,1,128], index: 1, kind: input, shape index: {}]
  %s2 = inlined_call_operand.hbm [shape: f32[32,160], index: 2, kind: input, shape index: {}]
  %s3 = inlined_call_operand.vmem [shape: f32[32,1], index: 3, kind: input, shape index: {}]
  %s4 = inlined_call_operand.<no memory space> [shape: f32[1,1], index: 4, kind: input, shape index: {}]
  %s5 = inlined_call_operand.vmem [shape: f32[1,1,128], index: 5, kind: output, shape index: {}]
  %s6 = sld [smem:[#allocation0]]
  $region34: #{classification_forward_pallas.1} parent=0
    _
  %s8 = ssub.s32 1, %s6
  %s9 = scalar_select 0, %s8, %s6
  %10 = sst [smem:[#allocation2]] %s4
  $region1: #{classification_forward_pallas.1} parent=0
    #allocation3 [shape = 'u8[32768]{0}', space=vmem, size = 0x8000, scoped, tag = 'input window, operand 2, single buffered']
    #allocation4 [shape = 's32[1]{0}', space=sflag, size = 0x4, scoped, tag = 'scoped memory for classification_forward_pallas.1']
    %11 = vsyncpa [#allocation4], 0
    // Predicated region
    $region2: #{classification_forward_pallas.1} parent=1 // pred_check
      _
    $region3: #{classification_forward_pallas.1} parent=1 // pred_check_branch
      %13 = sbr.rel (0) target = $region5
    $region4: #{classification_forward_pallas.1} parent=1 // pred_region
      _
    $region5: #{classification_forward_pallas.1} parent=1 // pred_fallthru
      _
    // Predicated region
    $region6: #{classification_forward_pallas.1} parent=1 // pred_check
      _
    $region7: #{classification_forward_pallas.1} parent=1 // pred_check_branch
      %15 = sbr.rel (0) target = $region9
    $region8: #{classification_forward_pallas.1} parent=1 // pred_region
      _
    $region9: #{classification_forward_pallas.1} parent=1 // pred_fallthru
      _
    // Predicated region
    $region10: #{classification_forward_pallas.1} parent=1 // pred_check
      _
    $region11: #{classification_forward_pallas.1} parent=1 // pred_check_branch
      %17 = sbr.rel (0) target = $region13
    $region12: #{classification_forward_pallas.1} parent=1 // pred_region
      %s19 = ssub.s32 1024, 1024
      %20 = vsyncadd [#allocation4], %s19
      %s21 = sshll.u32 [#allocation3], 4
      %s22 = int_to_ptr.vmem [resolvable:$true] %s21
      %27 = dma.hbm_to_vmem [thread:$0]  %s2, 1024, %s22, [#allocation4], 256, 256, 16
    $region13: #{classification_forward_pallas.1} parent=1 // pred_fallthru
      _
    // Predicated region
    $region14: #{classification_forward_pallas.1} parent=1 // pred_check
      _
    $region15: #{classification_forward_pallas.1} parent=1 // pred_check_branch
      %29 = sbr.rel (0) target = $region17
    $region16: #{classification_forward_pallas.1} parent=1 // pred_region
      _
    $region17: #{classification_forward_pallas.1} parent=1 // pred_fallthru
      _
    // Predicated region
    $region18: #{classification_forward_pallas.1} parent=1 // pred_check
      _
    $region19: #{classification_forward_pallas.1} parent=1 // pred_check_branch
      %31 = sbr.rel (0) target = $region21
    $region20: #{classification_forward_pallas.1} parent=1 // pred_region
      _
    $region21: #{classification_forward_pallas.1} parent=1 // pred_fallthru
      _
    // Predicated region
    $region22: #{classification_forward_pallas.1} parent=1 // pred_check
      _
    $region23: #{classification_forward_pallas.1} parent=1 // pred_check_branch
      %33 = sbr.rel (0) target = $region25
    $region24: #{classification_forward_pallas.1} parent=1 // pred_region
      %34 = dma.done [#allocation4], 1024
    $region25: #{classification_forward_pallas.1} parent=1 // pred_fallthru
      _
    %v35 = vld [vmem:[%s0] sm:$0x1]
    %v36 = vld [vmem:[%s1] sm:$0x1]
    %v37 = vadd.s32 %v36, 56
    %v38 = vlaneseq
    %v39 = vshrl.u32 %v38, 7
    %v40 = vadd.s32 %v39, 8
    %v41 = vadd.s32 %v39, 16
    %v42 = vadd.s32 %v39, 24
    %v43 = vadd.s32 %v39, 32
    %v44 = vadd.s32 %v39, 40
    %v45 = vadd.s32 %v39, 48
    %v46 = vadd.s32 %v39, 56
    %v47 = vadd.s32 %v39, 64
    %v48 = vadd.s32 %v39, 72
    %v49 = vadd.s32 %v39, 80
    %v50 = vadd.s32 %v39, 88
    %v51 = vadd.s32 %v39, 96
    %v52 = vadd.s32 %v39, 104
    %v53 = vadd.s32 %v39, 112
    %v54 = vadd.s32 %v39, 120
    %v55 = vadd.s32 %v39, 128
    %v56 = vadd.s32 %v39, 136
    %v57 = vadd.s32 %v39, 144
    %v58 = vadd.s32 %v39, 152
    %v59 = vlaneseq
    %v60 = vshrl.u32 %v59, 7
    %v61 = vsub.s32 0, %v60
    %v62 = vrot.slane %v35, %v61
    %vm63 = vcmp.eq.s32.totalorder %v39, %v62
    %vm64 = vcmp.eq.s32.totalorder %v40, %v62
    %vm65 = vcmp.eq.s32.totalorder %v41, %v62
    %vm66 = vcmp.eq.s32.totalorder %v42, %v62
    %vm67 = vcmp.eq.s32.totalorder %v43, %v62
    %vm68 = vcmp.eq.s32.totalorder %v44, %v62
    %vm69 = vcmp.eq.s32.totalorder %v45, %v62
    %vm70 = vcmp.eq.s32.totalorder %v46, %v62
    %vm71 = vcmp.eq.s32.totalorder %v47, %v62
    %vm72 = vcmp.eq.s32.totalorder %v48, %v62
    %vm73 = vcmp.eq.s32.totalorder %v49, %v62
    %vm74 = vcmp.eq.s32.totalorder %v50, %v62
    %vm75 = vcmp.eq.s32.totalorder %v51, %v62
    %vm76 = vcmp.eq.s32.totalorder %v52, %v62
    %vm77 = vcmp.eq.s32.totalorder %v53, %v62
    %vm78 = vcmp.eq.s32.totalorder %v54, %v62
    %vm79 = vcmp.eq.s32.totalorder %v55, %v62
    %vm80 = vcmp.eq.s32.totalorder %v56, %v62
    %vm81 = vcmp.eq.s32.totalorder %v57, %v62
    %vm82 = vcmp.eq.s32.totalorder %v58, %v62
    %v83 = vlaneseq
    %v84 = vshrl.u32 %v83, 7
    %v85 = vsub.s32 0, %v84
    %v86 = vrot.slane %v37, %v85
    %vm87 = vcmp.eq.s32.totalorder %v39, %v86
    %vm88 = vcmp.eq.s32.totalorder %v40, %v86
    %vm89 = vcmp.eq.s32.totalorder %v41, %v86
    %vm90 = vcmp.eq.s32.totalorder %v42, %v86
    %vm91 = vcmp.eq.s32.totalorder %v43, %v86
    %vm92 = vcmp.eq.s32.totalorder %v44, %v86
    %vm93 = vcmp.eq.s32.totalorder %v45, %v86
    %vm94 = vcmp.eq.s32.totalorder %v46, %v86
    %vm95 = vcmp.eq.s32.totalorder %v47, %v86
    %vm96 = vcmp.eq.s32.totalorder %v48, %v86
    %vm97 = vcmp.eq.s32.totalorder %v49, %v86
    %vm98 = vcmp.eq.s32.totalorder %v50, %v86
    %vm99 = vcmp.eq.s32.totalorder %v51, %v86
    %vm100 = vcmp.eq.s32.totalorder %v52, %v86
    %vm101 = vcmp.eq.s32.totalorder %v53, %v86
    %vm102 = vcmp.eq.s32.totalorder %v54, %v86
    %vm103 = vcmp.eq.s32.totalorder %v55, %v86
    %vm104 = vcmp.eq.s32.totalorder %v56, %v86
    %vm105 = vcmp.eq.s32.totalorder %v57, %v86
    %vm106 = vcmp.eq.s32.totalorder %v58, %v86
    %vm107 = vmor %vm63, %vm87
    %vm108 = vmor %vm64, %vm88
    %vm109 = vmor %vm65, %vm89
    %vm110 = vmor %vm66, %vm90
    %vm111 = vmor %vm67, %vm91
    %vm112 = vmor %vm68, %vm92
    %vm113 = vmor %vm69, %vm93
    %vm114 = vmor %vm70, %vm94
    %vm115 = vmor %vm71, %vm95
    %vm116 = vmor %vm72, %vm96
    %vm117 = vmor %vm73, %vm97
    %vm118 = vmor %vm74, %vm98
    %vm119 = vmor %vm75, %vm99
    %vm120 = vmor %vm76, %vm100
    %vm121 = vmor %vm77, %vm101
    %vm122 = vmor %vm78, %vm102
    %vm123 = vmor %vm79, %vm103
    %vm124 = vmor %vm80, %vm104
    %vm125 = vmor %vm81, %vm105
    %vm126 = vmor %vm82, %vm106
    %v127 = vsel %vm107, 1, 0
    %v128 = vsel %vm108, 1, 0
    %v129 = vsel %vm109, 1, 0
    %v130 = vsel %vm110, 1, 0
    %v131 = vsel %vm111, 1, 0
    %v132 = vsel %vm112, 1, 0
    %v133 = vsel %vm113, 1, 0
    %v134 = vsel %vm114, 1, 0
    %v135 = vsel %vm115, 1, 0
    %v136 = vsel %vm116, 1, 0
    %v137 = vsel %vm117, 1, 0
    %v138 = vsel %vm118, 1, 0
    %v139 = vsel %vm119, 1, 0
    %v140 = vsel %vm120, 1, 0
    %v141 = vsel %vm121, 1, 0
    %v142 = vsel %vm122, 1, 0
    %v143 = vsel %vm123, 1, 0
    %v144 = vsel %vm124, 1, 0
    %v145 = vsel %vm125, 1, 0
    %v146 = vsel %vm126, 1, 0
    %v147 = vcvt.s32.f32 %v127
    %v148 = vcvt.s32.f32 %v128
    %v149 = vcvt.s32.f32 %v129
    %v150 = vcvt.s32.f32 %v130
    %v151 = vcvt.s32.f32 %v131
    %v152 = vcvt.s32.f32 %v132
    %v153 = vcvt.s32.f32 %v133
    %v154 = vcvt.s32.f32 %v134
    %v155 = vcvt.s32.f32 %v135
    %v156 = vcvt.s32.f32 %v136
    %v157 = vcvt.s32.f32 %v137
    %v158 = vcvt.s32.f32 %v138
    %v159 = vcvt.s32.f32 %v139
    %v160 = vcvt.s32.f32 %v140
    %v161 = vcvt.s32.f32 %v141
    %v162 = vcvt.s32.f32 %v142
    %v163 = vcvt.s32.f32 %v143
    %v164 = vcvt.s32.f32 %v144
    %v165 = vcvt.s32.f32 %v145
    %v166 = vcvt.s32.f32 %v146
    %v167 = vld [vmem:[#allocation3] sm:$0xff]
    %v168 = vld [vmem:[#allocation3 + $0x8] sm:$0xff]
    %v169 = vld [vmem:[#allocation3 + $0x10] sm:$0xff]
    %v170 = vld [vmem:[#allocation3 + $0x18] sm:$0xff]
    %v171 = vld [vmem:[#allocation3 + $0x20] sm:$0xff]
    %v172 = vld [vmem:[#allocation3 + $0x28] sm:$0xff]
    %v173 = vld [vmem:[#allocation3 + $0x30] sm:$0xff]
    %v174 = vld [vmem:[#allocation3 + $0x38] sm:$0xff]
    %vm175 = vcmask 261120
    %v177 = vsel %vm175, %v168, 0
    %v180 = vsel %vm175, %v170, 0
    %v183 = vsel %vm175, %v172, 0
    %v186 = vsel %vm175, %v174, 0
    %188 = vmatprep.subr.mxu0 0.0
    %189 = vmatpush1.msra.mxu0 %v147
    %190 = vmatprep.subr.mxu0 0.0
    %191 = vmatpush1.msra.mxu0 %v148
    %192 = vmatprep.subr.mxu0 0.0
    %193 = vmatpush1.msra.mxu0 %v149
    %194 = vmatprep.subr.mxu0 0.0
    %195 = vmatpush1.msra.mxu0 %v150
    %196 = vmatprep.subr.mxu0 0.0
    %197 = vmatpush1.msra.mxu0 %v151
    %198 = vmatprep.subr.mxu0 0.0
    %199 = vmatpush1.msra.mxu0 %v152
    %200 = vmatprep.subr.mxu0 0.0
    %201 = vmatpush1.msra.mxu0 %v153
    %202 = vmatprep.subr.mxu0 0.0
    %203 = vmatpush1.msra.mxu0 %v154
    %204 = vmatprep.subr.mxu0 0.0
    %205 = vmatpush1.msra.mxu0 %v155
    %206 = vmatprep.subr.mxu0 0.0
    %207 = vmatpush1.msra.mxu0 %v156
    %208 = vmatprep.subr.mxu0 0.0
    %209 = vmatpush1.msra.mxu0 %v157
    %210 = vmatprep.subr.mxu0 0.0
    %211 = vmatpush1.msra.mxu0 %v158
    %212 = vmatprep.subr.mxu0 0.0
    %213 = vmatpush1.msra.mxu0 %v159
    %214 = vmatprep.subr.mxu0 0.0
    %215 = vmatpush1.msra.mxu0 %v160
    %216 = vmatprep.subr.mxu0 0.0
    %217 = vmatpush1.msra.mxu0 %v161
    %218 = vmatprep.subr.mxu0 0.0
    %219 = vmatpush1.msra.mxu0 %v162
    %220 = vmatprep.subr.mxu0 0.0
    %221 = vmatpush1.msra.mxu0 %v163
    %222 = vmatprep.subr.mxu0 0.0
    %223 = vmatpush1.msra.mxu0 %v164
    %224 = vmatprep.subr.mxu0 0.0
    %225 = vmatpush1.msra.mxu0 %v165
    %226 = vmatprep.subr.mxu0 0.0
    %227 = vmatpush1.msra.mxu0 %v166
    %228 = vmatprep.subr.mxu0 0.0
    %229 = vmatpush1.msra.mxu0 0.0
    %230 = vmatprep.subr.mxu0 0.0
    %231 = vmatpush1.msra.mxu0 0.0
    %232 = vmatprep.subr.mxu0 0.0
    %233 = vmatpush1.msra.mxu0 0.0
    %234 = vmatprep.subr.mxu0 0.0
    %235 = vmatpush1.msra.mxu0 0.0
    %236 = vmatprep.subr.mxu0 0.0
    %237 = vmatpush1.msra.mxu0 0.0
    %238 = vmatprep.subr.mxu0 0.0
    %239 = vmatpush1.msra.mxu0 0.0
    %240 = vmatprep.subr.mxu0 0.0
    %241 = vmatpush1.msra.mxu0 0.0
    %242 = vmatprep.subr.mxu0 0.0
    %243 = vmatpush1.msra.mxu0 0.0
    %244 = vmatprep.subr.mxu0 0.0
    %245 = vmatpush1.msra.mxu0 0.0
    %246 = vmatprep.subr.mxu0 0.0
    %247 = vmatpush1.msra.mxu0 0.0
    %248 = vmatprep.subr.mxu0 0.0
    %249 = vmatpush1.msra.mxu0 0.0
    %250 = vmatprep.subr.mxu0 0.0
    %251 = vmatpush1.msra.mxu0 0.0
    %252 = vmatprep.mubr.f32.mxu0 %v177
    %253 = vmatmul.mubr.f32.gmra.mrb[0].mxu0 %v167
    %v254 = vpop.f32.mrb[0].mxu0
    %v255 = vadd.f32 0.0, %v254
    %v256 = vpop.f32.mrb[0].mxu0
    %257 = vmatprep.mubr.f32.mxu0 %v180
    %258 = vmatmul.mubr.f32.gmra.mrb[0].mxu0 %v169
    %v259 = vpop.f32.mrb[0].mxu0
    %v260 = vadd.f32 0.0, %v259
    %v261 = vpop.f32.mrb[0].mxu0
    %262 = vmatprep.mubr.f32.mxu0 %v183
    %263 = vmatmul.mubr.f32.gmra.mrb[0].mxu0 %v171
    %v264 = vpop.f32.mrb[0].mxu0
    %v265 = vadd.f32 0.0, %v264
    %v266 = vpop.f32.mrb[0].mxu0
    %267 = vmatprep.mubr.f32.mxu0 %v186
    %268 = vmatmul.mubr.f32.gmra.mrb[0].mxu0 %v173
    %v269 = vpop.f32.mrb[0].mxu0
    %v270 = vadd.f32 0.0, %v269
    %v271 = vpop.f32.mrb[0].mxu0
    %272 = vdwg.mxu0
    %v273 = vmax.f32 %v255, 0.0
    %v274 = vmax.f32 %v260, 0.0
    %v275 = vmax.f32 %v265, 0.0
    %v276 = vmax.f32 %v270, 0.0
    %v277 = vld [vmem:[%s3] sm:$0xff]
    %v278 = vld [vmem:[%s3 + $0x8] sm:$0xff]
    %v279 = vld [vmem:[%s3 + $0x10] sm:$0xff]
    %v280 = vld [vmem:[%s3 + $0x18] sm:$0xff]
    %282 = vset.pattern.permute.xlu0 0
    %283 = vperm.xlu0 %282, %v277
    %v284 = vpop.permute.xlu0 %283
    %287 = vset.pattern.permute.xlu0 0
    %288 = vperm.xlu0 %287, %v278
    %v289 = vpop.permute.xlu0 %288
    %292 = vset.pattern.permute.xlu0 0
    %293 = vperm.xlu0 %292, %v279
    %v294 = vpop.permute.xlu0 %293
    %297 = vset.pattern.permute.xlu0 0
    %298 = vperm.xlu0 %297, %v280
    %v299 = vpop.permute.xlu0 %298
    %v301 = vmul.f32 %v273, %v284
    %v302 = vmul.f32 %v274, %v289
    %v303 = vmul.f32 %v275, %v294
    %v304 = vmul.f32 %v276, %v299
    %v305 = vadd.f32 %v301, %v302
    %v306 = vadd.f32 %v305, %v303
    %v307 = vadd.f32 %v306, %v304
    %v308 = vrot.slane %v307, 4
    %v309 = vadd.f32 %v307, %v308
    %v310 = vrot.slane %v309, 2
    %v311 = vadd.f32 %v309, %v310
    %v312 = vrot.slane %v311, 1
    %v313 = vadd.f32 %v311, %v312
    %s314 = sld [smem:[#allocation2]]
    %v315 = vstv %s314
    %v316 = vadd.f32 %v313, %v315
    %v317 = vxor.u32 %v316, 2147483648
    %v318 = vmul.f32 %v317, 1.442695
    %v319 = vpow.pop %v318
    %v320 = vadd.f32 %v319, 1.0
    %v321 = vrcp.pop %v320
    %v322 = vmul.f32 1.0, %v321
    %323 = vst [vmem:[%s5] sm:$0x1] %v322
    // Predicated region
    $region26: #{classification_forward_pallas.1} parent=1 // pred_check
      _
    $region27: #{classification_forward_pallas.1} parent=1 // pred_check_branch
      %325 = sbr.rel (0) target = $region29
    $region28: #{classification_forward_pallas.1} parent=1 // pred_region
      _
    $region29: #{classification_forward_pallas.1} parent=1 // pred_fallthru
      _
    // Predicated region
    $region30: #{classification_forward_pallas.1} parent=1 // pred_check
      _
    $region31: #{classification_forward_pallas.1} parent=1 // pred_check_branch
      %327 = sbr.rel (0) target = $region33
    $region32: #{classification_forward_pallas.1} parent=1 // pred_region
      _
    $region33: #{classification_forward_pallas.1} parent=1 // pred_fallthru
      _
    %328 = vsyncpa [#allocation4], 1

</llo_original>
